<compile_context>
chip_gen: v6e
topology: v6e:2x2x1
jax: 0.10.0
libtpu: 0.0.40
codegen_flags: <defaults>
</compile_context>

<pallas_src>
import jax
import jax.numpy as jnp
from jax.experimental import pallas as pl
from jax.experimental.pallas import tpu as pltpu

_LANE = 128        # vreg lane width
_TB_MAX = 16384    # max batch-tile (lane) width per grid step
_K_MIN = 32        # pad fc1 contraction dim (20) up to a clean sublane multiple


def _round_up(x, m):
    return (x + m - 1) // m * m


def _cdiv(a, b):
    return (a + b - 1) // b


def _fwd_mlp_kernel(xT_ref, w1_ref, b1_ref, w2_ref, b2_ref, w3_ref, b3_ref, oT_ref):
    """One lane-dense batch tile: out = W3 @ relu(W2 @ relu(W1 @ xT + b1) + b2) + b3."""
    xT = xT_ref[...]                                                       # [in_pad, TB]
    cdt = xT.dtype                                                         # compute dtype
    h1 = jnp.dot(w1_ref[...], xT, preferred_element_type=jnp.float32)
    h1 = jnp.maximum(h1 + b1_ref[...], 0.0).astype(cdt)                    # [hidden, TB]
    h2 = jnp.dot(w2_ref[...], h1, preferred_element_type=jnp.float32)
    h2 = jnp.maximum(h2 + b2_ref[...], 0.0).astype(cdt)                    # [hidden, TB]
    out = jnp.dot(w3_ref[...], h2, preferred_element_type=jnp.float32) + b3_ref[...]
    oT_ref[...] = out.astype(oT_ref.dtype)                                 # [out, TB]


@jax.jit
def fwd_model(x, w1, b1, w2, b2, w3, b3):
    """FwdModel.forward.

    x  : [B, state_shape + n_agents]
    w1 : [hidden, state_shape + n_agents]   (PyTorch fc1.weight layout)
    w2 : [hidden, hidden]                   (fc2.weight)
    w3 : [state_shape, hidden]              (fc4.weight)
    b* : [out_features]
    returns [B, state_shape]
    """
    B, in_dim = x.shape
    hidden = w1.shape[0]
    out_dim = w3.shape[0]
    dtype = x.dtype

    in_pad = max(_K_MIN, _round_up(in_dim, 8))          # fc1 K dim, sublane-clean

    # Balanced batch tile: as large as possible (amortize per-step overhead and
    # hit the HBM roofline), while keeping >= 2 grid steps for big batches
    # (v7x megacore) and a nearly-full trailing tile (pad <= grid*128 rows).
    n_steps = max(2, _cdiv(B, _TB_MAX))
    tb = max(_LANE, _round_up(_cdiv(B, n_steps), _LANE))
    b_pad = _round_up(B, tb)
    grid = (b_pad // tb,)

    # Lane-dense (transposed) input with the fc1 contraction dim zero-padded so
    # padded rows contribute exactly zero.  allow_input_fusion below lets XLA
    # fuse this producer into the kernel operand where possible.
    xT = jnp.zeros((in_pad, b_pad), dtype).at[:in_dim, :B].set(x.T)
    w1p = jnp.zeros((hidden, in_pad), dtype).at[:, :in_dim].set(w1.astype(dtype))
    w2c = w2.astype(dtype)
    w3c = w3.astype(dtype)
    b1c = b1.reshape(hidden, 1).astype(dtype)
    b2c = b2.reshape(hidden, 1).astype(dtype)
    b3c = b3.reshape(out_dim, 1).astype(dtype)

    itemsize = jnp.dtype(dtype).itemsize
    cost = pl.CostEstimate(
        flops=2 * b_pad * (in_pad * hidden + hidden * hidden + hidden * out_dim),
        transcendentals=0,
        bytes_accessed=(in_pad * b_pad + out_dim * b_pad) * itemsize
        + (hidden * in_pad + hidden * hidden + out_dim * hidden
           + 2 * hidden + out_dim) * itemsize,
    )

    oT = pl.pallas_call(
        _fwd_mlp_kernel,
        out_shape=jax.ShapeDtypeStruct((out_dim, b_pad), dtype),
        grid=grid,
        in_specs=[
            pl.BlockSpec((in_pad, tb), lambda i: (0, i)),       # xT batch tile (streamed)
            pl.BlockSpec((hidden, in_pad), lambda i: (0, 0)),   # w1 (VMEM-resident)
            pl.BlockSpec((hidden, 1), lambda i: (0, 0)),        # b1
            pl.BlockSpec((hidden, hidden), lambda i: (0, 0)),   # w2
            pl.BlockSpec((hidden, 1), lambda i: (0, 0)),        # b2
            pl.BlockSpec((out_dim, hidden), lambda i: (0, 0)),  # w3
            pl.BlockSpec((out_dim, 1), lambda i: (0, 0)),       # b3
        ],
        out_specs=pl.BlockSpec((out_dim, tb), lambda i: (0, i)),
        compiler_params=pltpu.CompilerParams(
            dimension_semantics=("parallel",),                  # megacore on v7x
            allow_input_fusion=[True, False, False, False, False, False, False],
        ),
        cost_estimate=cost,
    )(xT, w1p, b1c, w2c, b2c, w3c, b3c)

    # Keep the kernel output lane-dense; one small XLA transpose back to [B, out].
    return oT[:, :B].T


def init_linear_params(key, in_features, out_features, dtype=jnp.float32):
    """PyTorch-style uniform(-1/sqrt(fan_in), 1/sqrt(fan_in)); weight in [out, in]."""
    kw, kb = jax.random.split(key)
    bound = 1.0 / float(in_features) ** 0.5
    w = jax.random.uniform(kw, (out_features, in_features), dtype, -bound, bound)
    b = jax.random.uniform(kb, (out_features,), dtype, -bound, bound)
    return w, b


def reference_forward(x, w1, b1, w2, b2, w3, b3):
    h1 = jax.nn.relu(x @ w1.T + b1)
    h2 = jax.nn.relu(h1 @ w2.T + b2)
    return h2 @ w3.T + b3


if __name__ == "__main__":
    # Shapes consistent with the module:
    #   args.state_shape = 16, args.n_agents = 4, args.icm_hidden_dim = 32
    state_shape = 16
    n_agents = 4
    hidden = 32
    in_dim = state_shape + n_agents

    key = jax.random.PRNGKey(0)
    k_x, k_x2, k1, k2, k3 = jax.random.split(key, 5)

    w1, b1 = init_linear_params(k1, in_dim, hidden)
    w2, b2 = init_linear_params(k2, hidden, hidden)
    w3, b3 = init_linear_params(k3, hidden, state_shape)

    # Main small-batch check (B=8).
    batch = 8
    x = jax.random.normal(k_x, (batch, in_dim), jnp.float32)
    out = jax.block_until_ready(fwd_model(x, w1, b1, w2, b2, w3, b3))
    ref = reference_forward(x, w1, b1, w2, b2, w3, b3)
    assert out.shape == (batch, state_shape), out.shape
    assert jnp.allclose(out, ref, atol=1e-4, rtol=1e-4), "mismatch vs reference (B=8)"

    # Second check exercising multi-step grid / balanced tiling (B not a multiple of 128).
    batch2 = 300
    x2 = jax.random.normal(k_x2, (batch2, in_dim), jnp.float32)
    out2 = jax.block_until_ready(fwd_model(x2, w1, b1, w2, b2, w3, b3))
    ref2 = reference_forward(x2, w1, b1, w2, b2, w3, b3)
    assert out2.shape == (batch2, state_shape), out2.shape
    assert jnp.allclose(out2, ref2, atol=1e-4, rtol=1e-4), "mismatch vs reference (B=300)"

    print("KERNEL_OK")
</pallas_src>

<mosaic_0001>
module attributes {stable_mosaic.version = 11 : i64} {
  func.func @_fwd_mlp_kernel(%arg0: i32, %arg1: memref<32x128xf32, #tpu.memory_space<vmem>>, %arg2: memref<32x32xf32, #tpu.memory_space<vmem>>, %arg3: memref<32x1xf32, #tpu.memory_space<vmem>>, %arg4: memref<32x32xf32, #tpu.memory_space<vmem>>, %arg5: memref<32x1xf32, #tpu.memory_space<vmem>>, %arg6: memref<16x32xf32, #tpu.memory_space<vmem>>, %arg7: memref<16x1xf32, #tpu.memory_space<vmem>>, %arg8: memref<16x128xf32, #tpu.memory_space<vmem>>) attributes {dimension_semantics = [#tpu.dimension_semantics<parallel>], iteration_bounds = array<i64: 1>, scalar_prefetch = 0 : i64, scratch_operands = 0 : i64, tpu.core_type = #tpu.core_type<tc>, window_params = [{transform_indices = @transform_0, window_bounds = array<i64: 32, 128>}, {pipeline_mode = #tpu.pipeline_mode<synchronous>, transform_indices = @transform_1, window_bounds = array<i64: 32, 32>}, {pipeline_mode = #tpu.pipeline_mode<synchronous>, transform_indices = @transform_2, window_bounds = array<i64: 32, 1>}, {pipeline_mode = #tpu.pipeline_mode<synchronous>, transform_indices = @transform_3, window_bounds = array<i64: 32, 32>}, {pipeline_mode = #tpu.pipeline_mode<synchronous>, transform_indices = @transform_4, window_bounds = array<i64: 32, 1>}, {pipeline_mode = #tpu.pipeline_mode<synchronous>, transform_indices = @transform_5, window_bounds = array<i64: 16, 32>}, {pipeline_mode = #tpu.pipeline_mode<synchronous>, transform_indices = @transform_6, window_bounds = array<i64: 16, 1>}, {transform_indices = @transform_7, window_bounds = array<i64: 16, 128>}]} {
    %c0 = arith.constant 0 : index
    %c0_0 = arith.constant 0 : index
    %0 = vector.load %arg1[%c0, %c0_0] : memref<32x128xf32, #tpu.memory_space<vmem>>, vector<32x128xf32>
    %c0_1 = arith.constant 0 : index
    %c0_2 = arith.constant 0 : index
    %1 = vector.load %arg2[%c0_1, %c0_2] : memref<32x32xf32, #tpu.memory_space<vmem>>, vector<32x32xf32>
    %cst = arith.constant dense<0.000000e+00> : vector<32x128xf32>
    %2 = tpu.matmul %1, %0, %cst {dimension_numbers = #tpu.dot_dimension_numbers<[1], [0], [0], [1], [0, 0, 1, 1], [], []>} : vector<32x32xf32>, vector<32x128xf32>, vector<32x128xf32> -> vector<32x128xf32>
    %c0_3 = arith.constant 0 : index
    %c0_4 = arith.constant 0 : index
    %3 = vector.load %arg3[%c0_3, %c0_4] : memref<32x1xf32, #tpu.memory_space<vmem>>, vector<32x1xf32>
    %4 = vector.broadcast %3 : vector<32x1xf32> to vector<32x128xf32>
    %5 = arith.addf %2, %4 : vector<32x128xf32>
    %cst_5 = arith.constant 0.000000e+00 : f32
    %6 = vector.broadcast %cst_5 : f32 to vector<32x128xf32>
    %7 = arith.maximumf %5, %6 : vector<32x128xf32>
    %c0_6 = arith.constant 0 : index
    %c0_7 = arith.constant 0 : index
    %8 = vector.load %arg4[%c0_6, %c0_7] : memref<32x32xf32, #tpu.memory_space<vmem>>, vector<32x32xf32>
    %cst_8 = arith.constant dense<0.000000e+00> : vector<32x128xf32>
    %9 = tpu.matmul %8, %7, %cst_8 {dimension_numbers = #tpu.dot_dimension_numbers<[1], [0], [0], [1], [0, 0, 1, 1], [], []>} : vector<32x32xf32>, vector<32x128xf32>, vector<32x128xf32> -> vector<32x128xf32>
    %c0_9 = arith.constant 0 : index
    %c0_10 = arith.constant 0 : index
    %10 = vector.load %arg5[%c0_9, %c0_10] : memref<32x1xf32, #tpu.memory_space<vmem>>, vector<32x1xf32>
    %11 = vector.broadcast %10 : vector<32x1xf32> to vector<32x128xf32>
    %12 = arith.addf %9, %11 : vector<32x128xf32>
    %cst_11 = arith.constant 0.000000e+00 : f32
    %13 = vector.broadcast %cst_11 : f32 to vector<32x128xf32>
    %14 = arith.maximumf %12, %13 : vector<32x128xf32>
    %c0_12 = arith.constant 0 : index
    %c0_13 = arith.constant 0 : index
    %15 = vector.load %arg6[%c0_12, %c0_13] : memref<16x32xf32, #tpu.memory_space<vmem>>, vector<16x32xf32>
    %cst_14 = arith.constant dense<0.000000e+00> : vector<16x128xf32>
    %16 = tpu.matmul %15, %14, %cst_14 {dimension_numbers = #tpu.dot_dimension_numbers<[1], [0], [0], [1], [0, 0, 1, 1], [], []>} : vector<16x32xf32>, vector<32x128xf32>, vector<16x128xf32> -> vector<16x128xf32>
    %c0_15 = arith.constant 0 : index
    %c0_16 = arith.constant 0 : index
    %17 = vector.load %arg7[%c0_15, %c0_16] : memref<16x1xf32, #tpu.memory_space<vmem>>, vector<16x1xf32>
    %18 = vector.broadcast %17 : vector<16x1xf32> to vector<16x128xf32>
    %19 = arith.addf %16, %18 : vector<16x128xf32>
    %c0_17 = arith.constant 0 : index
    %c0_18 = arith.constant 0 : index
    %20 = vector.load %arg8[%c0_17, %c0_18] : memref<16x128xf32, #tpu.memory_space<vmem>>, vector<16x128xf32>
    tpu.vector_store %arg8[%c0_17, %c0_18], %19 {strides = array<i32>} : memref<16x128xf32, #tpu.memory_space<vmem>>, vector<16x128xf32>,
    return
  }
  func.func @transform_0(%arg0: i32) -> (i32, i32) {
    %c0_i32 = arith.constant 0 : i32
    %c0_i32_0 = arith.constant 0 : i32
    return %c0_i32, %arg0 : i32, i32
  }
  func.func @transform_1(%arg0: i32) -> (i32, i32) {
    %c0_i32 = arith.constant 0 : i32
    %c0_i32_0 = arith.constant 0 : i32
    %c0_i32_1 = arith.constant 0 : i32
    return %c0_i32, %c0_i32_0 : i32, i32
  }
  func.func @transform_2(%arg0: i32) -> (i32, i32) {
    %c0_i32 = arith.constant 0 : i32
    %c0_i32_0 = arith.constant 0 : i32
    %c0_i32_1 = arith.constant 0 : i32
    return %c0_i32, %c0_i32_0 : i32, i32
  }
  func.func @transform_3(%arg0: i32) -> (i32, i32) {
    %c0_i32 = arith.constant 0 : i32
    %c0_i32_0 = arith.constant 0 : i32
    %c0_i32_1 = arith.constant 0 : i32
    return %c0_i32, %c0_i32_0 : i32, i32
  }
  func.func @transform_4(%arg0: i32) -> (i32, i32) {
    %c0_i32 = arith.constant 0 : i32
    %c0_i32_0 = arith.constant 0 : i32
    %c0_i32_1 = arith.constant 0 : i32
    return %c0_i32, %c0_i32_0 : i32, i32
  }
  func.func @transform_5(%arg0: i32) -> (i32, i32) {
    %c0_i32 = arith.constant 0 : i32
    %c0_i32_0 = arith.constant 0 : i32
    %c0_i32_1 = arith.constant 0 : i32
    return %c0_i32, %c0_i32_0 : i32, i32
  }
  func.func @transform_6(%arg0: i32) -> (i32, i32) {
    %c0_i32 = arith.constant 0 : i32
    %c0_i32_0 = arith.constant 0 : i32
    %c0_i32_1 = arith.constant 0 : i32
    return %c0_i32, %c0_i32_0 : i32, i32
  }
  func.func @transform_7(%arg0: i32) -> (i32, i32) {
    %c0_i32 = arith.constant 0 : i32
    %c0_i32_0 = arith.constant 0 : i32
    return %c0_i32, %arg0 : i32, i32
  }
}

</mosaic_0001>

<llo_original>
// kernel: fwd_model.2
$region0: #{fwd_model.2}
  #allocation0 [shape = 'u32[]', space=smem, size = 0x4, offset = 0x4, fixed_abs, tag = 'smem constant byte address 0x4 - core index']
  #allocation1 [shape = 'u32[144,128]{1,0:T(1,128)}', space=vmem, size = 0x12000, scoped, tag = 'internal scratch']
  #allocation2 [shape = 'u32[2048]{0}', space=vmem, size = 0x2000, scoped, tag = 'scoped memory for fwd_model.2']
  #allocation3 [shape = 'u32[2048]{0}', space=vmem, size = 0x2000, scoped, tag = 'scoped memory for fwd_model.2']
  #allocation4 [shape = 'u32[2048]{0}', space=vmem, size = 0x2000, scoped, tag = 'scoped memory for fwd_model.2']
  #allocation5 [shape = 'u32[2048]{0}', space=vmem, size = 0x2000, scoped, tag = 'scoped memory for fwd_model.2']
  #allocation6 [shape = 'u32[2048]{0}', space=vmem, size = 0x2000, scoped, tag = 'scoped memory for fwd_model.2']
  %s0 = inlined_call_operand.vmem [shape: f32[32,32], index: 0, kind: input, shape index: {}]
  %s1 = inlined_call_operand.vmem [shape: f32[32,1], index: 1, kind: input, shape index: {}]
  %s2 = inlined_call_operand.vmem [shape: f32[32,32], index: 2, kind: input, shape index: {}]
  %s3 = inlined_call_operand.vmem [shape: f32[32,1], index: 3, kind: input, shape index: {}]
  %s4 = inlined_call_operand.vmem [shape: f32[16,32], index: 4, kind: input, shape index: {}]
  %s5 = inlined_call_operand.vmem [shape: f32[16,1], index: 5, kind: input, shape index: {}]
  %s6 = inlined_call_operand.vmem [shape: f32[20,8], index: 6, kind: input, shape index: {}]
  %s7 = inlined_call_operand.<no memory space> [shape: f32[], index: 7, kind: input, shape index: {}]
  %s8 = inlined_call_operand.vmem [shape: f32[16,128], index: 8, kind: output, shape index: {}]
  %s9 = sld [smem:[#allocation0]]
  $region38: #{fwd_model.2} parent=0
    _
  %s11 = ssub.s32 1, %s9
  %s12 = scalar_select 0, %s11, %s9
  %v13 = vstv %s7
  $region1: #{fwd_model.2} parent=0
    #allocation7 [shape = 'u8[16384]{0}', space=vmem, size = 0x4000, dematerialized = true, scoped, tag = 'FusionAdapter Buffer %fusion.1 = f32[32,128]{1,0:T(8,128)} fusion(%param_6.1, %param_7), kind=kLoop, calls=%fused_computation.1.clone, metadata={op_name="jit(fwd_model)/scatter" stack_frame_id=8}']
    // Predicated region
    $region2: #{fwd_model.2} parent=1 // pred_check
      _
    $region3: #{fwd_model.2} parent=1 // pred_check_branch
      %15 = sbr.rel (0) target = $region5
    $region4: #{fwd_model.2} parent=1 // pred_region
      _
    $region5: #{fwd_model.2} parent=1 // pred_fallthru
      _
    // Predicated region
    $region6: #{fwd_model.2} parent=1 // pred_check
      _
    $region7: #{fwd_model.2} parent=1 // pred_check_branch
      %17 = sbr.rel (0) target = $region9
    $region8: #{fwd_model.2} parent=1 // pred_region
      _
    $region9: #{fwd_model.2} parent=1 // pred_fallthru
      _
    // Predicated region
    $region10: #{fwd_model.2} parent=1 // pred_check
      _
    $region11: #{fwd_model.2} parent=1 // pred_check_branch
      %19 = sbr.rel (0) target = $region13
    $region12: #{fwd_model.2} parent=1 // pred_region
      _
    $region13: #{fwd_model.2} parent=1 // pred_fallthru
      _
    // Predicated region
    $region14: #{fwd_model.2} parent=1 // pred_check
      _
    $region15: #{fwd_model.2} parent=1 // pred_check_branch
      %21 = sbr.rel (0) target = $region17
    $region16: #{fwd_model.2} parent=1 // pred_region
      _
    $region17: #{fwd_model.2} parent=1 // pred_fallthru
      _
    // Predicated region
    $region18: #{fwd_model.2} parent=1 // pred_check
      _
    $region19: #{fwd_model.2} parent=1 // pred_check_branch
      %23 = sbr.rel (0) target = $region21
    $region20: #{fwd_model.2} parent=1 // pred_region
      _
    $region21: #{fwd_model.2} parent=1 // pred_fallthru
      _
    // Predicated region
    $region22: #{fwd_model.2} parent=1 // pred_check
      _
    $region23: #{fwd_model.2} parent=1 // pred_check_branch
      %25 = sbr.rel (0) target = $region25
    $region24: #{fwd_model.2} parent=1 // pred_region
      _
    $region25: #{fwd_model.2} parent=1 // pred_fallthru
      _
    // Predicated region
    $region26: #{fwd_model.2} parent=1 // pred_check
      _
    $region27: #{fwd_model.2} parent=1 // pred_check_branch
      %27 = sbr.rel (0) target = $region29
    $region28: #{fwd_model.2} parent=1 // pred_region
      _
    $region29: #{fwd_model.2} parent=1 // pred_fallthru
      _
    %v28 = vld [vmem:[%s6] sm:$0xff]
    %v29 = vlaneseq
    %v30 = vshrl.u32 %v29, 7
    %vm32 = vcmp.lt.s32.totalorder %v30, 20
    %v33 = vsel %vm32, %v28, %v13
    %v34 = vlaneseq
    %v35 = vand.u32 %v34, 127
    %vm37 = vcmp.lt.s32.totalorder %v35, 8
    %v38 = vsel %vm37, %v33, %v13
    %s40 = ssub.s32 256, 1
    %41 = vst [vmem:[#allocation7] sm:%s40] %v38
    %s42 = scalar_lea.vmem %s6, 8
    %v43 = vld [vmem:[%s42] sm:$0xff]
    %v44 = vlaneseq
    %v45 = vshrl.u32 %v44, 7
    %v46 = vadd.s32 %v45, 8
    %vm47 = vcmp.lt.s32.totalorder %v46, 20
    %v48 = vsel %vm47, %v43, %v13
    %v49 = vlaneseq
    %v50 = vand.u32 %v49, 127
    %vm52 = vcmp.lt.s32.totalorder %v50, 8
    %v53 = vsel %vm52, %v48, %v13
    %s54 = scalar_lea.vmem [#allocation7], 8
    %s56 = ssub.s32 256, 1
    %57 = vst [vmem:[%s54] sm:%s56] %v53
    %s58 = scalar_lea.vmem %s6, 16
    %v59 = vld [vmem:[%s58] sm:$0xff]
    %v60 = vlaneseq
    %v61 = vshrl.u32 %v60, 7
    %v62 = vadd.s32 %v61, 16
    %vm63 = vcmp.lt.s32.totalorder %v62, 20
    %v64 = vsel %vm63, %v59, %v13
    %v65 = vlaneseq
    %v66 = vand.u32 %v65, 127
    %vm68 = vcmp.lt.s32.totalorder %v66, 8
    %v69 = vsel %vm68, %v64, %v13
    %s70 = scalar_lea.vmem [#allocation7], 16
    %s72 = ssub.s32 256, 1
    %73 = vst [vmem:[%s70] sm:%s72] %v69
    %s74 = scalar_lea.vmem [#allocation7], 24
    %s76 = ssub.s32 256, 1
    %77 = vst [vmem:[%s74] sm:%s76] %v13
    %v78 = vld [vmem:[#allocation7] sm:$0xff]
    %v79 = vld [vmem:[#allocation7 + $0x8] sm:$0xff]
    %v80 = vld [vmem:[#allocation7 + $0x10] sm:$0xff]
    %v81 = vld [vmem:[#allocation7 + $0x18] sm:$0xff]
    %v82 = vld [vmem:[%s0] sm:$0xff]
    %v83 = vld [vmem:[%s0 + $0x8] sm:$0xff]
    %v84 = vld [vmem:[%s0 + $0x10] sm:$0xff]
    %v85 = vld [vmem:[%s0 + $0x18] sm:$0xff]
    %v86 = vld [vmem:[%s1] sm:$0xff]
    %v87 = vld [vmem:[%s1 + $0x8] sm:$0xff]
    %v88 = vld [vmem:[%s1 + $0x10] sm:$0xff]
    %v89 = vld [vmem:[%s1 + $0x18] sm:$0xff]
    %91 = vset.pattern.permute.xlu0 0
    %92 = vperm.xlu0 %91, %v86
    %v93 = vpop.permute.xlu0 %92
    %96 = vset.pattern.permute.xlu0 0
    %97 = vperm.xlu0 %96, %v87
    %v98 = vpop.permute.xlu0 %97
    %101 = vset.pattern.permute.xlu0 0
    %102 = vperm.xlu0 %101, %v88
    %v103 = vpop.permute.xlu0 %102
    %106 = vset.pattern.permute.xlu0 0
    %107 = vperm.xlu0 %106, %v89
    %v108 = vpop.permute.xlu0 %107
    %vm110 = vcmask 261120
    %v112 = vsel %vm110, %v82, 0
    %v115 = vsel %vm110, %v83, 0
    %v118 = vsel %vm110, %v84, 0
    %v121 = vsel %vm110, %v85, 0
    %123 = vmatprep.subr.mxu0 0.0
    %124 = vmatpush1.msra.mxu0 0.0
    %125 = vmatprep.subr.mxu0 0.0
    %126 = vmatpush1.msra.mxu0 0.0
    %127 = vmatprep.subr.mxu0 0.0
    %128 = vmatpush1.msra.mxu0 0.0
    %129 = vmatprep.subr.mxu0 0.0
    %130 = vmatpush1.msra.mxu0 0.0
    %131 = vmatprep.subr.mxu0 0.0
    %132 = vmatpush1.msra.mxu0 0.0
    %133 = vmatprep.subr.mxu0 0.0
    %134 = vmatpush1.msra.mxu0 0.0
    %135 = vmatprep.subr.mxu0 0.0
    %136 = vmatpush1.msra.mxu0 0.0
    %137 = vmatprep.subr.mxu0 0.0
    %138 = vmatpush1.msra.mxu0 0.0
    %139 = vmatprep.subr.mxu0 0.0
    %140 = vmatpush1.msra.mxu0 0.0
    %141 = vmatprep.subr.mxu0 0.0
    %142 = vmatpush1.msra.mxu0 0.0
    %143 = vmatprep.subr.mxu0 0.0
    %144 = vmatpush1.msra.mxu0 0.0
    %145 = vmatprep.subr.mxu0 0.0
    %146 = vmatpush1.msra.mxu0 0.0
    %147 = vmatprep.subr.mxu0 0.0
    %148 = vmatpush1.msra.mxu0 %v81
    %149 = vmatprep.subr.mxu0 0.0
    %150 = vmatpush1.msra.mxu0 %v80
    %151 = vmatprep.subr.mxu0 0.0
    %152 = vmatpush1.msra.mxu0 %v79
    %153 = vmatprep.subr.mxu0 0.0
    %154 = vmatpush1.msra.mxu0 %v78
    %155 = vmatprep.subr.mxu0 0.0
    %156 = vmatpush2.msra.mxu0 0.0
    %157 = vmatprep.subr.mxu0 0.0
    %158 = vmatpush2.msra.mxu0 0.0
    %159 = vmatprep.subr.mxu0 0.0
    %160 = vmatpush2.msra.mxu0 0.0
    %161 = vmatprep.subr.mxu0 0.0
    %162 = vmatpush2.msra.mxu0 0.0
    %163 = vmatprep.subr.mxu0 0.0
    %164 = vmatpush2.msra.mxu0 0.0
    %165 = vmatprep.subr.mxu0 0.0
    %166 = vmatpush2.msra.mxu0 0.0
    %167 = vmatprep.subr.mxu0 0.0
    %168 = vmatpush2.msra.mxu0 0.0
    %169 = vmatprep.subr.mxu0 0.0
    %170 = vmatpush2.msra.mxu0 0.0
    %171 = vmatprep.subr.mxu0 0.0
    %172 = vmatpush2.msra.mxu0 0.0
    %173 = vmatprep.subr.mxu0 0.0
    %174 = vmatpush2.msra.mxu0 0.0
    %175 = vmatprep.subr.mxu0 0.0
    %176 = vmatpush2.msra.mxu0 0.0
    %177 = vmatprep.subr.mxu0 0.0
    %178 = vmatpush2.msra.mxu0 0.0
    %179 = vmatprep.subr.mxu0 0.0
    %180 = vmatpush2.msra.mxu0 0.0
    %181 = vmatprep.subr.mxu0 0.0
    %182 = vmatpush2.msra.mxu0 0.0
    %183 = vmatprep.subr.mxu0 0.0
    %184 = vmatpush2.msra.mxu0 0.0
    %185 = vmatprep.subr.mxu0 0.0
    %186 = vmatpush2.msra.mxu0 0.0
    %187 = vmatprep.mubr.f32.mxu0 0.0
    %188 = vmatmul.mubr.f32.gmra.mxu0 %v112
    %v189 = vpop.f32.mrf.mxu0
    %v190 = vadd.f32 %v93, %v189
    %v191 = vpop.f32.mrf.mxu0
    %192 = vmatprep.mubr.f32.mxu0 0.0
    %193 = vmatmul.mubr.f32.gmra.mxu0 %v115
    %v194 = vpop.f32.mrf.mxu0
    %v195 = vadd.f32 %v98, %v194
    %v196 = vpop.f32.mrf.mxu0
    %197 = vmatprep.mubr.f32.mxu0 0.0
    %198 = vmatmul.mubr.f32.gmra.mxu0 %v118
    %v199 = vpop.f32.mrf.mxu0
    %v200 = vadd.f32 %v103, %v199
    %v201 = vpop.f32.mrf.mxu0
    %202 = vmatprep.mubr.f32.mxu0 0.0
    %203 = vmatmul.mubr.f32.gmra.mxu0 %v121
    %v204 = vpop.f32.mrf.mxu0
    %v205 = vadd.f32 %v108, %v204
    %v206 = vpop.f32.mrf.mxu0
    %207 = vdwg.mxu0
    %v208 = vmax.f32 %v190, 0.0
    %v209 = vmax.f32 %v195, 0.0
    %v210 = vmax.f32 %v200, 0.0
    %v211 = vmax.f32 %v205, 0.0
    %v212 = vld [vmem:[%s2] sm:$0xff]
    %v213 = vld [vmem:[%s2 + $0x8] sm:$0xff]
    %v214 = vld [vmem:[%s2 + $0x10] sm:$0xff]
    %v215 = vld [vmem:[%s2 + $0x18] sm:$0xff]
    %v216 = vld [vmem:[%s3] sm:$0xff]
    %v217 = vld [vmem:[%s3 + $0x8] sm:$0xff]
    %v218 = vld [vmem:[%s3 + $0x10] sm:$0xff]
    %v219 = vld [vmem:[%s3 + $0x18] sm:$0xff]
    %221 = vset.pattern.permute.xlu0 0
    %222 = vperm.xlu0 %221, %v216
    %v223 = vpop.permute.xlu0 %222
    %226 = vset.pattern.permute.xlu0 0
    %227 = vperm.xlu0 %226, %v217
    %v228 = vpop.permute.xlu0 %227
    %231 = vset.pattern.permute.xlu0 0
    %232 = vperm.xlu0 %231, %v218
    %v233 = vpop.permute.xlu0 %232
    %236 = vset.pattern.permute.xlu0 0
    %237 = vperm.xlu0 %236, %v219
    %v238 = vpop.permute.xlu0 %237
    %v241 = vsel %vm110, %v212, 0
    %v244 = vsel %vm110, %v213, 0
    %v247 = vsel %vm110, %v214, 0
    %v250 = vsel %vm110, %v215, 0
    %252 = vmatprep.subr.mxu0 0.0
    %253 = vmatpush1.msra.mxu0 0.0
    %254 = vmatprep.subr.mxu0 0.0
    %255 = vmatpush1.msra.mxu0 0.0
    %256 = vmatprep.subr.mxu0 0.0
    %257 = vmatpush1.msra.mxu0 0.0
    %258 = vmatprep.subr.mxu0 0.0
    %259 = vmatpush1.msra.mxu0 0.0
    %260 = vmatprep.subr.mxu0 0.0
    %261 = vmatpush1.msra.mxu0 0.0
    %262 = vmatprep.subr.mxu0 0.0
    %263 = vmatpush1.msra.mxu0 0.0
    %264 = vmatprep.subr.mxu0 0.0
    %265 = vmatpush1.msra.mxu0 0.0
    %266 = vmatprep.subr.mxu0 0.0
    %267 = vmatpush1.msra.mxu0 0.0
    %268 = vmatprep.subr.mxu0 0.0
    %269 = vmatpush1.msra.mxu0 0.0
    %270 = vmatprep.subr.mxu0 0.0
    %271 = vmatpush1.msra.mxu0 0.0
    %272 = vmatprep.subr.mxu0 0.0
    %273 = vmatpush1.msra.mxu0 0.0
    %274 = vmatprep.subr.mxu0 0.0
    %275 = vmatpush1.msra.mxu0 0.0
    %276 = vmatprep.subr.mxu0 0.0
    %277 = vmatpush1.msra.mxu0 %v211
    %278 = vmatprep.subr.mxu0 0.0
    %279 = vmatpush1.msra.mxu0 %v210
    %280 = vmatprep.subr.mxu0 0.0
    %281 = vmatpush1.msra.mxu0 %v209
    %282 = vmatprep.subr.mxu0 0.0
    %283 = vmatpush1.msra.mxu0 %v208
    %284 = vmatprep.subr.mxu0 0.0
    %285 = vmatpush2.msra.mxu0 0.0
    %286 = vmatprep.subr.mxu0 0.0
    %287 = vmatpush2.msra.mxu0 0.0
    %288 = vmatprep.subr.mxu0 0.0
    %289 = vmatpush2.msra.mxu0 0.0
    %290 = vmatprep.subr.mxu0 0.0
    %291 = vmatpush2.msra.mxu0 0.0
    %292 = vmatprep.subr.mxu0 0.0
    %293 = vmatpush2.msra.mxu0 0.0
    %294 = vmatprep.subr.mxu0 0.0
    %295 = vmatpush2.msra.mxu0 0.0
    %296 = vmatprep.subr.mxu0 0.0
    %297 = vmatpush2.msra.mxu0 0.0
    %298 = vmatprep.subr.mxu0 0.0
    %299 = vmatpush2.msra.mxu0 0.0
    %300 = vmatprep.subr.mxu0 0.0
    %301 = vmatpush2.msra.mxu0 0.0
    %302 = vmatprep.subr.mxu0 0.0
    %303 = vmatpush2.msra.mxu0 0.0
    %304 = vmatprep.subr.mxu0 0.0
    %305 = vmatpush2.msra.mxu0 0.0
    %306 = vmatprep.subr.mxu0 0.0
    %307 = vmatpush2.msra.mxu0 0.0
    %308 = vmatprep.subr.mxu0 0.0
    %309 = vmatpush2.msra.mxu0 0.0
    %310 = vmatprep.subr.mxu0 0.0
    %311 = vmatpush2.msra.mxu0 0.0
    %312 = vmatprep.subr.mxu0 0.0
    %313 = vmatpush2.msra.mxu0 0.0
    %314 = vmatprep.subr.mxu0 0.0
    %315 = vmatpush2.msra.mxu0 0.0
    %316 = vmatprep.mubr.f32.mxu0 0.0
    %317 = vmatmul.mubr.f32.gmra.mxu0 %v241
    %v318 = vpop.f32.mrf.mxu0
    %v319 = vadd.f32 %v223, %v318
    %v320 = vpop.f32.mrf.mxu0
    %321 = vmatprep.mubr.f32.mxu0 0.0
    %322 = vmatmul.mubr.f32.gmra.mxu0 %v244
    %v323 = vpop.f32.mrf.mxu0
    %v324 = vadd.f32 %v228, %v323
    %v325 = vpop.f32.mrf.mxu0
    %326 = vmatprep.mubr.f32.mxu0 0.0
    %327 = vmatmul.mubr.f32.gmra.mxu0 %v247
    %v328 = vpop.f32.mrf.mxu0
    %v329 = vadd.f32 %v233, %v328
    %v330 = vpop.f32.mrf.mxu0
    %331 = vmatprep.mubr.f32.mxu0 0.0
    %332 = vmatmul.mubr.f32.gmra.mxu0 %v250
    %v333 = vpop.f32.mrf.mxu0
    %v334 = vadd.f32 %v238, %v333
    %v335 = vpop.f32.mrf.mxu0
    %336 = vdwg.mxu0
    %v337 = vmax.f32 %v319, 0.0
    %v338 = vmax.f32 %v324, 0.0
    %v339 = vmax.f32 %v329, 0.0
    %v340 = vmax.f32 %v334, 0.0
    %v341 = vld [vmem:[%s4] sm:$0xff]
    %v342 = vld [vmem:[%s4 + $0x8] sm:$0xff]
    %v343 = vld [vmem:[%s5] sm:$0xff]
    %v344 = vld [vmem:[%s5 + $0x8] sm:$0xff]
    %346 = vset.pattern.permute.xlu0 0
    %347 = vperm.xlu0 %346, %v343
    %v348 = vpop.permute.xlu0 %347
    %351 = vset.pattern.permute.xlu0 0
    %352 = vperm.xlu0 %351, %v344
    %v353 = vpop.permute.xlu0 %352
    %v356 = vsel %vm110, %v341, 0
    %v359 = vsel %vm110, %v342, 0
    %361 = vmatprep.subr.mxu0 0.0
    %362 = vmatpush1.msra.mxu0 0.0
    %363 = vmatprep.subr.mxu0 0.0
    %364 = vmatpush1.msra.mxu0 0.0
    %365 = vmatprep.subr.mxu0 0.0
    %366 = vmatpush1.msra.mxu0 0.0
    %367 = vmatprep.subr.mxu0 0.0
    %368 = vmatpush1.msra.mxu0 0.0
    %369 = vmatprep.subr.mxu0 0.0
    %370 = vmatpush1.msra.mxu0 0.0
    %371 = vmatprep.subr.mxu0 0.0
    %372 = vmatpush1.msra.mxu0 0.0
    %373 = vmatprep.subr.mxu0 0.0
    %374 = vmatpush1.msra.mxu0 0.0
    %375 = vmatprep.subr.mxu0 0.0
    %376 = vmatpush1.msra.mxu0 0.0
    %377 = vmatprep.subr.mxu0 0.0
    %378 = vmatpush1.msra.mxu0 0.0
    %379 = vmatprep.subr.mxu0 0.0
    %380 = vmatpush1.msra.mxu0 0.0
    %381 = vmatprep.subr.mxu0 0.0
    %382 = vmatpush1.msra.mxu0 0.0
    %383 = vmatprep.subr.mxu0 0.0
    %384 = vmatpush1.msra.mxu0 0.0
    %385 = vmatprep.subr.mxu0 0.0
    %386 = vmatpush1.msra.mxu0 %v340
    %387 = vmatprep.subr.mxu0 0.0
    %388 = vmatpush1.msra.mxu0 %v339
    %389 = vmatprep.subr.mxu0 0.0
    %390 = vmatpush1.msra.mxu0 %v338
    %391 = vmatprep.subr.mxu0 0.0
    %392 = vmatpush1.msra.mxu0 %v337
    %393 = vmatprep.subr.mxu0 0.0
    %394 = vmatpush2.msra.mxu0 0.0
    %395 = vmatprep.subr.mxu0 0.0
    %396 = vmatpush2.msra.mxu0 0.0
    %397 = vmatprep.subr.mxu0 0.0
    %398 = vmatpush2.msra.mxu0 0.0
    %399 = vmatprep.subr.mxu0 0.0
    %400 = vmatpush2.msra.mxu0 0.0
    %401 = vmatprep.subr.mxu0 0.0
    %402 = vmatpush2.msra.mxu0 0.0
    %403 = vmatprep.subr.mxu0 0.0
    %404 = vmatpush2.msra.mxu0 0.0
    %405 = vmatprep.subr.mxu0 0.0
    %406 = vmatpush2.msra.mxu0 0.0
    %407 = vmatprep.subr.mxu0 0.0
    %408 = vmatpush2.msra.mxu0 0.0
    %409 = vmatprep.subr.mxu0 0.0
    %410 = vmatpush2.msra.mxu0 0.0
    %411 = vmatprep.subr.mxu0 0.0
    %412 = vmatpush2.msra.mxu0 0.0
    %413 = vmatprep.subr.mxu0 0.0
    %414 = vmatpush2.msra.mxu0 0.0
    %415 = vmatprep.subr.mxu0 0.0
    %416 = vmatpush2.msra.mxu0 0.0
    %417 = vmatprep.subr.mxu0 0.0
    %418 = vmatpush2.msra.mxu0 0.0
    %419 = vmatprep.subr.mxu0 0.0
    %420 = vmatpush2.msra.mxu0 0.0
    %421 = vmatprep.subr.mxu0 0.0
    %422 = vmatpush2.msra.mxu0 0.0
    %423 = vmatprep.subr.mxu0 0.0
    %424 = vmatpush2.msra.mxu0 0.0
    %425 = vmatprep.mubr.f32.mxu0 0.0
    %426 = vmatmul.mubr.f32.gmra.mxu0 %v356
    %v427 = vpop.f32.mrf.mxu0
    %v428 = vadd.f32 %v348, %v427
    %v429 = vpop.f32.mrf.mxu0
    %430 = vmatprep.mubr.f32.mxu0 0.0
    %431 = vmatmul.mubr.f32.gmra.mxu0 %v359
    %v432 = vpop.f32.mrf.mxu0
    %v433 = vadd.f32 %v353, %v432
    %v434 = vpop.f32.mrf.mxu0
    %435 = vdwg.mxu0
    %436 = vst [vmem:[%s8] sm:$0xff] %v428
    %437 = vst [vmem:[%s8 + $0x8] sm:$0xff] %v433
    // Predicated region
    $region30: #{fwd_model.2} parent=1 // pred_check
      _
    $region31: #{fwd_model.2} parent=1 // pred_check_branch
      %439 = sbr.rel (0) target = $region33
    $region32: #{fwd_model.2} parent=1 // pred_region
      _
    $region33: #{fwd_model.2} parent=1 // pred_fallthru
      _
    // Predicated region
    $region34: #{fwd_model.2} parent=1 // pred_check
      _
    $region35: #{fwd_model.2} parent=1 // pred_check_branch
      %441 = sbr.rel (0) target = $region37
    $region36: #{fwd_model.2} parent=1 // pred_region
      _
    $region37: #{fwd_model.2} parent=1 // pred_fallthru
      _

</llo_original>
